<compile_context>
chip_gen: v7x
topology: tpu7x:2x2x1
jax: 0.10.0
libtpu: 0.0.40
codegen_flags: <defaults>
</compile_context>

<pallas_src>
import math

import jax
import jax.numpy as jnp
from jax.experimental import pallas as pl
from jax.experimental.pallas import tpu as pltpu


def critic_kernel(x_ref, w1_ref, b1_ref, w2_ref, b2_ref, w3_ref, b3_ref, o_ref):
    x = x_ref[...]                                      # (TB, obs_dim) bf16 stream

    # Layer 1: MXU matmul with f32 accumulation; bias + tanh in f32 (VPU/EUP).
    a1 = jnp.dot(x, w1_ref[...], preferred_element_type=jnp.float32) + b1_ref[...]
    h1 = jnp.tanh(a1).astype(w2_ref.dtype)

    # Layer 2.
    a2 = jnp.dot(h1, w2_ref[...], preferred_element_type=jnp.float32) + b2_ref[...]
    h2 = jnp.tanh(a2).astype(w3_ref.dtype)
    # NOTE: tanh runs at 32/128 lane occupancy here. Packing h1/h2 into full
    # 128-lane vregs (reshape (TB,32)->(TB/4,128)) would cut EUP pushes 4x,
    # but adds 4 XLU relayouts per tile; only worth enabling if a bundle dump
    # shows the EUP slot binding (MXU and obs DMA both have slack at this size).

    # Output layer: (TB, h2) @ (h2, 1) + scalar bias read from SMEM.
    v = jnp.dot(h2, w3_ref[...], preferred_element_type=jnp.float32) + b3_ref[0, 0]

    # Lane-dense epilogue: relayout the (TB, 1) column into the (1, 1, TB)
    # output block so the store is a full-width vst rather than masked vst.msk.
    o_ref[...] = v.reshape(o_ref.shape).astype(o_ref.dtype)


def _round_up(x, m):
    return ((x + m - 1) // m) * m


def mlp_critic_forward(obs, params, *, max_batch_tile=1024):
    """obs: (B, obs_dim). params: w1,b1,w2,b2,w3,b3 with w_j shaped (in, out).

    Returns (B,) value estimates, matching torch.squeeze(v_net(obs), -1).
    """
    w1, b1, w2, b2, w3, b3 = (
        params["w1"], params["b1"], params["w2"],
        params["b2"], params["w3"], params["b3"],
    )
    B, obs_dim = obs.shape
    h1 = w1.shape[1]
    h2 = w2.shape[1]

    # Batch tile: as large as practical (512+ reaches HBM roofline), 8-row aligned.
    tb = min(max_batch_tile, _round_up(B, 8))
    n_tiles = pl.cdiv(B, tb)
    b_pad = n_tiles * tb
    if b_pad != B:
        obs = jnp.pad(obs, ((0, b_pad - B), (0, 0)))

    resident = lambda shape: pl.BlockSpec(shape, lambda i: (0,) * len(shape))

    out = pl.pallas_call(
        critic_kernel,
        out_shape=jax.ShapeDtypeStruct((n_tiles, 1, tb), jnp.float32),
        grid=(n_tiles,),
        in_specs=[
            # Streamed per grid step -> double-buffered by the Pallas pipeline.
            pl.BlockSpec((tb, obs_dim), lambda i: (i, 0)),
            # Constant index_maps => fetched once, VMEM-resident across tiles.
            resident((obs_dim, h1)),
            resident((1, h1)),
            resident((h1, h2)),
            resident((1, h2)),
            resident((h2, 1)),
            # Scalar output bias in SMEM (no padded VMEM tile / per-step DMA).
            pl.BlockSpec(memory_space=pltpu.MemorySpace.SMEM),
        ],
        out_specs=pl.BlockSpec((1, 1, tb), lambda i: (i, 0, 0)),
        compiler_params=pltpu.CompilerParams(
            # "parallel": lets v7x shard batch tiles across its 2 TensorCores;
            # neutral on single-TC v5e/v6e.
            dimension_semantics=("parallel",),
        ),
    )(obs, w1, b1, w2, b2, w3, b3)

    # (n_tiles, 1, tb) -> (B,): undo batch tiling + the torch.squeeze(-1).
    return out.reshape(-1)[:B]


def init_params(key, obs_dim, hidden_sizes, *, weight_dtype=jnp.bfloat16):
    """torch.nn.Linear-style init (U[-1/sqrt(fan_in), +1/sqrt(fan_in)]).

    Weights are stored transposed vs torch, i.e. (in, out), and in bf16 so the
    kernel's HBM streams are half-width; biases stay f32 (added to the f32
    MXU accumulator).
    """
    sizes = [obs_dim] + list(hidden_sizes) + [1]
    params = {}
    for j in range(len(sizes) - 1):
        fan_in, fan_out = sizes[j], sizes[j + 1]
        key, kw, kb = jax.random.split(key, 3)
        bound = 1.0 / math.sqrt(fan_in)
        w = jax.random.uniform(kw, (fan_in, fan_out), jnp.float32, -bound, bound)
        b = jax.random.uniform(kb, (1, fan_out), jnp.float32, -bound, bound)
        params[f"w{j + 1}"] = w.astype(weight_dtype)
        params[f"b{j + 1}"] = b
    return params


def reference_forward(obs, params):
    """Pure-JAX reference of the same bf16-fed, f32-accumulated math."""
    a1 = jnp.dot(obs, params["w1"], preferred_element_type=jnp.float32) + params["b1"]
    h1 = jnp.tanh(a1).astype(params["w2"].dtype)
    a2 = jnp.dot(h1, params["w2"], preferred_element_type=jnp.float32) + params["b2"]
    h2 = jnp.tanh(a2).astype(params["w3"].dtype)
    v = jnp.dot(h2, params["w3"], preferred_element_type=jnp.float32) + params["b3"]
    return jnp.squeeze(v, -1)


if __name__ == "__main__":
    key = jax.random.PRNGKey(0)
    batch, obs_dim = 8, 16
    hidden_sizes = (32, 32)  # standard PPO critic; activation = tanh

    k_obs, k_params = jax.random.split(key)
    obs = jax.random.normal(k_obs, (batch, obs_dim), jnp.float32).astype(jnp.bfloat16)
    params = init_params(k_params, obs_dim, hidden_sizes)

    v = mlp_critic_forward(obs, params)
    jax.block_until_ready(v)

    v_ref = reference_forward(obs, params)
    assert v.shape == (batch,), v.shape
    # Loose-ish tolerance: inputs/weights are stored in bf16, so a single-ulp
    # rounding difference in an intermediate cast can move the output by ~1e-3.
    assert jnp.allclose(v, v_ref, atol=1e-2, rtol=1e-2), (v, v_ref)

    print("KERNEL_OK")
</pallas_src>

<mosaic_0001>
module attributes {stable_mosaic.version = 11 : i64} {
  func.func @critic_kernel(%arg0: i32, %arg1: memref<8x16xbf16, #tpu.memory_space<vmem>>, %arg2: memref<16x32xbf16, #tpu.memory_space<vmem>>, %arg3: memref<1x32xf32, #tpu.memory_space<vmem>>, %arg4: memref<32x32xbf16, #tpu.memory_space<vmem>>, %arg5: memref<1x32xf32, #tpu.memory_space<vmem>>, %arg6: memref<32x1xbf16, #tpu.memory_space<vmem>>, %arg7: memref<1x1xf32, #tpu.memory_space<smem>>, %arg8: memref<1x1x8xf32, #tpu.memory_space<vmem>>) attributes {dimension_semantics = [#tpu.dimension_semantics<parallel>], iteration_bounds = array<i64: 1>, scalar_prefetch = 0 : i64, scratch_operands = 0 : i64, tpu.core_type = #tpu.core_type<tc>, window_params = [{transform_indices = @transform_0, window_bounds = array<i64: 8, 16>}, {pipeline_mode = #tpu.pipeline_mode<synchronous>, transform_indices = @transform_1, window_bounds = array<i64: 16, 32>}, {pipeline_mode = #tpu.pipeline_mode<synchronous>, transform_indices = @transform_2, window_bounds = array<i64: 1, 32>}, {pipeline_mode = #tpu.pipeline_mode<synchronous>, transform_indices = @transform_3, window_bounds = array<i64: 32, 32>}, {pipeline_mode = #tpu.pipeline_mode<synchronous>, transform_indices = @transform_4, window_bounds = array<i64: 1, 32>}, {pipeline_mode = #tpu.pipeline_mode<synchronous>, transform_indices = @transform_5, window_bounds = array<i64: 32, 1>}, {transform_indices = @transform_6, window_bounds = array<i64: 1, 1>}, {transform_indices = @transform_7, window_bounds = array<i64: 1, 1, 8>}]} {
    %c0 = arith.constant 0 : index
    %c0_0 = arith.constant 0 : index
    %0 = vector.load %arg1[%c0, %c0_0] : memref<8x16xbf16, #tpu.memory_space<vmem>>, vector<8x16xbf16>
    %c0_1 = arith.constant 0 : index
    %c0_2 = arith.constant 0 : index
    %1 = vector.load %arg2[%c0_1, %c0_2] : memref<16x32xbf16, #tpu.memory_space<vmem>>, vector<16x32xbf16>
    %cst = arith.constant dense<0.000000e+00> : vector<8x32xf32>
    %2 = tpu.matmul %0, %1, %cst {dimension_numbers = #tpu.dot_dimension_numbers<[1], [0], [0], [1], [0, 0, 1, 1], [], []>} : vector<8x16xbf16>, vector<16x32xbf16>, vector<8x32xf32> -> vector<8x32xf32>
    %c0_3 = arith.constant 0 : index
    %c0_4 = arith.constant 0 : index
    %3 = vector.load %arg3[%c0_3, %c0_4] : memref<1x32xf32, #tpu.memory_space<vmem>>, vector<1x32xf32>
    %4 = vector.broadcast %3 : vector<1x32xf32> to vector<8x32xf32>
    %5 = arith.addf %2, %4 : vector<8x32xf32>
    %6 = math.tanh %5 : vector<8x32xf32>
    %7 = arith.truncf %6 : vector<8x32xf32> to vector<8x32xbf16>
    %c0_5 = arith.constant 0 : index
    %c0_6 = arith.constant 0 : index
    %8 = vector.load %arg4[%c0_5, %c0_6] : memref<32x32xbf16, #tpu.memory_space<vmem>>, vector<32x32xbf16>
    %cst_7 = arith.constant dense<0.000000e+00> : vector<8x32xf32>
    %9 = tpu.matmul %7, %8, %cst_7 {dimension_numbers = #tpu.dot_dimension_numbers<[1], [0], [0], [1], [0, 0, 1, 1], [], []>} : vector<8x32xbf16>, vector<32x32xbf16>, vector<8x32xf32> -> vector<8x32xf32>
    %c0_8 = arith.constant 0 : index
    %c0_9 = arith.constant 0 : index
    %10 = vector.load %arg5[%c0_8, %c0_9] : memref<1x32xf32, #tpu.memory_space<vmem>>, vector<1x32xf32>
    %11 = vector.broadcast %10 : vector<1x32xf32> to vector<8x32xf32>
    %12 = arith.addf %9, %11 : vector<8x32xf32>
    %13 = math.tanh %12 : vector<8x32xf32>
    %14 = arith.truncf %13 : vector<8x32xf32> to vector<8x32xbf16>
    %c0_10 = arith.constant 0 : index
    %c0_11 = arith.constant 0 : index
    %15 = vector.load %arg6[%c0_10, %c0_11] : memref<32x1xbf16, #tpu.memory_space<vmem>>, vector<32x1xbf16>
    %cst_12 = arith.constant dense<0.000000e+00> : vector<8x1xf32>
    %16 = tpu.matmul %14, %15, %cst_12 {dimension_numbers = #tpu.dot_dimension_numbers<[1], [0], [0], [1], [0, 0, 1, 1], [], []>} : vector<8x32xbf16>, vector<32x1xbf16>, vector<8x1xf32> -> vector<8x1xf32>
    %c0_13 = arith.constant 0 : index
    %c0_14 = arith.constant 0 : index
    %17 = memref.load %arg7[%c0_13, %c0_14] : memref<1x1xf32, #tpu.memory_space<smem>>
    %18 = vector.broadcast %17 : f32 to vector<8x1xf32>
    %19 = arith.addf %16, %18 : vector<8x1xf32>
    %20 = vector.shape_cast %19 : vector<8x1xf32> to vector<1x1x8xf32>
    %c0_15 = arith.constant 0 : index
    %c0_16 = arith.constant 0 : index
    %c0_17 = arith.constant 0 : index
    %21 = vector.load %arg8[%c0_15, %c0_16, %c0_17] : memref<1x1x8xf32, #tpu.memory_space<vmem>>, vector<1x1x8xf32>
    tpu.vector_store %arg8[%c0_15, %c0_16, %c0_17], %20 {strides = array<i32>} : memref<1x1x8xf32, #tpu.memory_space<vmem>>, vector<1x1x8xf32>,
    return
  }
  func.func @transform_0(%arg0: i32) -> (i32, i32) {
    %c0_i32 = arith.constant 0 : i32
    %c0_i32_0 = arith.constant 0 : i32
    return %arg0, %c0_i32 : i32, i32
  }
  func.func @transform_1(%arg0: i32) -> (i32, i32) {
    %c0_i32 = arith.constant 0 : i32
    %c0_i32_0 = arith.constant 0 : i32
    %c0_i32_1 = arith.constant 0 : i32
    return %c0_i32, %c0_i32_0 : i32, i32
  }
  func.func @transform_2(%arg0: i32) -> (i32, i32) {
    %c0_i32 = arith.constant 0 : i32
    %c0_i32_0 = arith.constant 0 : i32
    %c0_i32_1 = arith.constant 0 : i32
    return %c0_i32, %c0_i32_0 : i32, i32
  }
  func.func @transform_3(%arg0: i32) -> (i32, i32) {
    %c0_i32 = arith.constant 0 : i32
    %c0_i32_0 = arith.constant 0 : i32
    %c0_i32_1 = arith.constant 0 : i32
    return %c0_i32, %c0_i32_0 : i32, i32
  }
  func.func @transform_4(%arg0: i32) -> (i32, i32) {
    %c0_i32 = arith.constant 0 : i32
    %c0_i32_0 = arith.constant 0 : i32
    %c0_i32_1 = arith.constant 0 : i32
    return %c0_i32, %c0_i32_0 : i32, i32
  }
  func.func @transform_5(%arg0: i32) -> (i32, i32) {
    %c0_i32 = arith.constant 0 : i32
    %c0_i32_0 = arith.constant 0 : i32
    %c0_i32_1 = arith.constant 0 : i32
    return %c0_i32, %c0_i32_0 : i32, i32
  }
  func.func @transform_6(%arg0: i32) -> (i32, i32) {
    %c0_i32 = arith.constant 0 : i32
    %c0_i32_0 = arith.constant 0 : i32
    %c0_i32_1 = arith.constant 0 : i32
    return %c0_i32, %c0_i32_0 : i32, i32
  }
  func.func @transform_7(%arg0: i32) -> (i32, i32, i32) {
    %c0_i32 = arith.constant 0 : i32
    %c0_i32_0 = arith.constant 0 : i32
    %c0_i32_1 = arith.constant 0 : i32
    return %arg0, %c0_i32, %c0_i32_0 : i32, i32, i32
  }
}

</mosaic_0001>

<llo_original>
// kernel: tpu_custom_call.1
$region0: #{tpu_custom_call.1}
  #allocation0 [shape = 'u32[]', space=smem, size = 0x4, offset = 0x4, fixed_abs, tag = 'smem constant byte address 0x4 - core index']
  #allocation1 [shape = 'u32[144,128]{1,0:T(1,128)}', space=vmem, size = 0x12000, scoped, tag = 'internal scratch']
  #allocation2 [shape = 'f32[1,1]{1,0:T(1,128)S(6)}', space=smem, size = 0x200, scoped, tag = 'scoped memory for tpu_custom_call.1']
  %s0 = inlined_call_operand.vmem [shape: bf16[8,16], index: 0, kind: input, shape index: {}]
  %s1 = inlined_call_operand.vmem [shape: bf16[16,32], index: 1, kind: input, shape index: {}]
  %s2 = inlined_call_operand.vmem [shape: f32[1,32], index: 2, kind: input, shape index: {}]
  %s3 = inlined_call_operand.vmem [shape: bf16[32,32], index: 3, kind: input, shape index: {}]
  %s4 = inlined_call_operand.vmem [shape: f32[1,32], index: 4, kind: input, shape index: {}]
  %s5 = inlined_call_operand.vmem [shape: bf16[32,1], index: 5, kind: input, shape index: {}]
  %s6 = inlined_call_operand.<no memory space> [shape: f32[1,1], index: 6, kind: input, shape index: {}]
  %s7 = inlined_call_operand.hbm [shape: f32[1,1,8], index: 7, kind: output, shape index: {}]
  %s8 = sld [smem:[#allocation0]]
  $region38: #{tpu_custom_call.1} parent=0
    _
  %s10 = ssub.s32 1, %s8
  %s11 = scalar_select 0, %s10, %s8
  %12 = sst [smem:[#allocation2]] %s6
  $region1: #{tpu_custom_call.1} parent=0
    #allocation3 [shape = 'u8[512]{0}', space=vmem, size = 0x400, scoped, tag = 'output window, operand 0, single buffered']
    #allocation4 [shape = 's32[1]{0}', space=sflag, size = 0x4, scoped, tag = 'scoped memory for tpu_custom_call.1']
    %13 = vsyncpa [#allocation4], 0
    // Predicated region
    $region2: #{tpu_custom_call.1} parent=1 // pred_check
      _
    $region3: #{tpu_custom_call.1} parent=1 // pred_check_branch
      %15 = sbr.rel (0) target = $region5
    $region4: #{tpu_custom_call.1} parent=1 // pred_region
      _
    $region5: #{tpu_custom_call.1} parent=1 // pred_fallthru
      _
    // Predicated region
    $region6: #{tpu_custom_call.1} parent=1 // pred_check
      _
    $region7: #{tpu_custom_call.1} parent=1 // pred_check_branch
      %17 = sbr.rel (0) target = $region9
    $region8: #{tpu_custom_call.1} parent=1 // pred_region
      _
    $region9: #{tpu_custom_call.1} parent=1 // pred_fallthru
      _
    // Predicated region
    $region10: #{tpu_custom_call.1} parent=1 // pred_check
      _
    $region11: #{tpu_custom_call.1} parent=1 // pred_check_branch
      %19 = sbr.rel (0) target = $region13
    $region12: #{tpu_custom_call.1} parent=1 // pred_region
      _
    $region13: #{tpu_custom_call.1} parent=1 // pred_fallthru
      _
    // Predicated region
    $region14: #{tpu_custom_call.1} parent=1 // pred_check
      _
    $region15: #{tpu_custom_call.1} parent=1 // pred_check_branch
      %21 = sbr.rel (0) target = $region17
    $region16: #{tpu_custom_call.1} parent=1 // pred_region
      _
    $region17: #{tpu_custom_call.1} parent=1 // pred_fallthru
      _
    // Predicated region
    $region18: #{tpu_custom_call.1} parent=1 // pred_check
      _
    $region19: #{tpu_custom_call.1} parent=1 // pred_check_branch
      %23 = sbr.rel (0) target = $region21
    $region20: #{tpu_custom_call.1} parent=1 // pred_region
      _
    $region21: #{tpu_custom_call.1} parent=1 // pred_fallthru
      _
    // Predicated region
    $region22: #{tpu_custom_call.1} parent=1 // pred_check
      _
    $region23: #{tpu_custom_call.1} parent=1 // pred_check_branch
      %25 = sbr.rel (0) target = $region25
    $region24: #{tpu_custom_call.1} parent=1 // pred_region
      _
    $region25: #{tpu_custom_call.1} parent=1 // pred_fallthru
      _
    // Predicated region
    $region26: #{tpu_custom_call.1} parent=1 // pred_check
      _
    $region27: #{tpu_custom_call.1} parent=1 // pred_check_branch
      %27 = sbr.rel (0) target = $region29
    $region28: #{tpu_custom_call.1} parent=1 // pred_region
      _
    $region29: #{tpu_custom_call.1} parent=1 // pred_fallthru
      _
    %v29 = vld [vmem:[%s0] sm:$0xf]
    %v30 = vld [vmem:[%s1] sm:$0xf]
    %v31 = vld [vmem:[%s1 + $0x4] sm:$0xf]
    %v32 = vld [vmem:[%s2] sm:$0x1]
    %v34 = vlaneseq
    %v35 = vshrl.u32 %v34, 7
    %v36 = vsub.s32 0, %v35
    %v37 = vrot.slane %v32, %v36
    %v41 = vunpack.c.l.b16 %v30
    %v42 = vunpack.c.l.b16 %v31
    %v43 = vpack.c.b16 %v42, %v41
    %vm45 = vcmask 130048
    %v47 = vsel %vm45, %v29, 0
    %49 = vmatprep.subr.bf16.mxu0 0
    %50 = vmatpush1.bf16.msra.mxu0 %v43
    %51 = vmatprep.subr.bf16.mxu0 0
    %52 = vmatpush1.bf16.msra.mxu0 0
    %53 = vmatprep.subr.bf16.mxu0 0
    %54 = vmatpush1.bf16.msra.mxu0 0
    %55 = vmatprep.subr.bf16.mxu0 0
    %56 = vmatpush1.bf16.msra.mxu0 0
    %57 = vmatprep.subr.bf16.mxu0 0
    %58 = vmatpush1.bf16.msra.mxu0 0
    %59 = vmatprep.subr.bf16.mxu0 0
    %60 = vmatpush1.bf16.msra.mxu0 0
    %61 = vmatprep.subr.bf16.mxu0 0
    %62 = vmatpush1.bf16.msra.mxu0 0
    %63 = vmatprep.subr.bf16.mxu0 0
    %64 = vmatpush1.bf16.msra.mxu0 0
    %65 = vmatprep.subr.bf16.mxu0 0
    %66 = vmatpush1.bf16.msra.mxu0 0
    %67 = vmatprep.subr.bf16.mxu0 0
    %68 = vmatpush1.bf16.msra.mxu0 0
    %69 = vmatprep.subr.bf16.mxu0 0
    %70 = vmatpush1.bf16.msra.mxu0 0
    %71 = vmatprep.subr.bf16.mxu0 0
    %72 = vmatpush1.bf16.msra.mxu0 0
    %73 = vmatprep.subr.bf16.mxu0 0
    %74 = vmatpush1.bf16.msra.mxu0 0
    %75 = vmatprep.subr.bf16.mxu0 0
    %76 = vmatpush1.bf16.msra.mxu0 0
    %77 = vmatprep.subr.bf16.mxu0 0
    %78 = vmatpush1.bf16.msra.mxu0 0
    %79 = vmatprep.subr.bf16.mxu0 0
    %80 = vmatpush1.bf16.msra.mxu0 0
    %81 = vmatprep.mubr.bf16.mxu0 0
    %82 = vmatmul.mubr.bf16.gmra.mrb[0].mxu0 %v47
    %v83 = vpop.f32.mrb[0].mxu0
    %v84 = vadd.f32 %v37, %v83
    %v85 = vpop.f32.mrb[0].mxu0
    %v86 = vpop.f32.mrb[0].mxu0
    %v87 = vpop.f32.mrb[0].mxu0
    %88 = vdwg.mxu0
    %v89 = vtanh.pop %v84
    %v90 = vpack.c.bf16 %v89, %v89
    %v91 = vld [vmem:[%s3] sm:$0xf]
    %v92 = vld [vmem:[%s3 + $0x4] sm:$0xf]
    %v93 = vld [vmem:[%s3 + $0x8] sm:$0xf]
    %v94 = vld [vmem:[%s3 + $0xc] sm:$0xf]
    %v95 = vld [vmem:[%s4] sm:$0x1]
    %v97 = vlaneseq
    %v98 = vshrl.u32 %v97, 7
    %v99 = vsub.s32 0, %v98
    %v100 = vrot.slane %v95, %v99
    %v106 = vunpack.c.l.b16 %v91
    %v107 = vunpack.c.l.b16 %v92
    %v108 = vunpack.c.l.b16 %v93
    %v109 = vunpack.c.l.b16 %v94
    %v110 = vpack.c.b16 %v107, %v106
    %v111 = vpack.c.b16 %v109, %v108
    %vm114 = vcmask 261120
    %v116 = vsel %vm114, %v90, 0
    %118 = vmatprep.subr.bf16.mxu0 0
    %119 = vmatpush1.bf16.msra.mxu0 %v110
    %120 = vmatprep.subr.bf16.mxu0 0
    %121 = vmatpush1.bf16.msra.mxu0 %v111
    %122 = vmatprep.subr.bf16.mxu0 0
    %123 = vmatpush1.bf16.msra.mxu0 0
    %124 = vmatprep.subr.bf16.mxu0 0
    %125 = vmatpush1.bf16.msra.mxu0 0
    %126 = vmatprep.subr.bf16.mxu0 0
    %127 = vmatpush1.bf16.msra.mxu0 0
    %128 = vmatprep.subr.bf16.mxu0 0
    %129 = vmatpush1.bf16.msra.mxu0 0
    %130 = vmatprep.subr.bf16.mxu0 0
    %131 = vmatpush1.bf16.msra.mxu0 0
    %132 = vmatprep.subr.bf16.mxu0 0
    %133 = vmatpush1.bf16.msra.mxu0 0
    %134 = vmatprep.subr.bf16.mxu0 0
    %135 = vmatpush1.bf16.msra.mxu0 0
    %136 = vmatprep.subr.bf16.mxu0 0
    %137 = vmatpush1.bf16.msra.mxu0 0
    %138 = vmatprep.subr.bf16.mxu0 0
    %139 = vmatpush1.bf16.msra.mxu0 0
    %140 = vmatprep.subr.bf16.mxu0 0
    %141 = vmatpush1.bf16.msra.mxu0 0
    %142 = vmatprep.subr.bf16.mxu0 0
    %143 = vmatpush1.bf16.msra.mxu0 0
    %144 = vmatprep.subr.bf16.mxu0 0
    %145 = vmatpush1.bf16.msra.mxu0 0
    %146 = vmatprep.subr.bf16.mxu0 0
    %147 = vmatpush1.bf16.msra.mxu0 0
    %148 = vmatprep.subr.bf16.mxu0 0
    %149 = vmatpush1.bf16.msra.mxu0 0
    %150 = vmatprep.mubr.bf16.mxu0 0
    %151 = vmatmul.mubr.bf16.gmra.mrb[0].mxu0 %v116
    %v152 = vpop.f32.mrb[0].mxu0
    %v153 = vadd.f32 %v100, %v152
    %v154 = vpop.f32.mrb[0].mxu0
    %v155 = vpop.f32.mrb[0].mxu0
    %v156 = vpop.f32.mrb[0].mxu0
    %157 = vdwg.mxu0
    %v158 = vtanh.pop %v153
    %v159 = vpack.c.bf16 %v158, %v158
    %v160 = vld [vmem:[%s5] sm:$0xf]
    %v161 = vld [vmem:[%s5 + $0x4] sm:$0xf]
    %v162 = vld [vmem:[%s5 + $0x8] sm:$0xf]
    %v163 = vld [vmem:[%s5 + $0xc] sm:$0xf]
    %s164 = sld [smem:[#allocation2]]
    %v165 = vstv %s164
    %v170 = vunpack.c.l.b16 %v160
    %v171 = vunpack.c.l.b16 %v161
    %v172 = vunpack.c.l.b16 %v162
    %v173 = vunpack.c.l.b16 %v163
    %v174 = vpack.c.b16 %v171, %v170
    %v175 = vpack.c.b16 %v173, %v172
    %v179 = vsel %vm114, %v159, 0
    %181 = vmatprep.subr.bf16.mxu0 0
    %182 = vmatpush1.bf16.msra.mxu0 %v174
    %183 = vmatprep.subr.bf16.mxu0 0
    %184 = vmatpush1.bf16.msra.mxu0 %v175
    %185 = vmatprep.subr.bf16.mxu0 0
    %186 = vmatpush1.bf16.msra.mxu0 0
    %187 = vmatprep.subr.bf16.mxu0 0
    %188 = vmatpush1.bf16.msra.mxu0 0
    %189 = vmatprep.subr.bf16.mxu0 0
    %190 = vmatpush1.bf16.msra.mxu0 0
    %191 = vmatprep.subr.bf16.mxu0 0
    %192 = vmatpush1.bf16.msra.mxu0 0
    %193 = vmatprep.subr.bf16.mxu0 0
    %194 = vmatpush1.bf16.msra.mxu0 0
    %195 = vmatprep.subr.bf16.mxu0 0
    %196 = vmatpush1.bf16.msra.mxu0 0
    %197 = vmatprep.subr.bf16.mxu0 0
    %198 = vmatpush1.bf16.msra.mxu0 0
    %199 = vmatprep.subr.bf16.mxu0 0
    %200 = vmatpush1.bf16.msra.mxu0 0
    %201 = vmatprep.subr.bf16.mxu0 0
    %202 = vmatpush1.bf16.msra.mxu0 0
    %203 = vmatprep.subr.bf16.mxu0 0
    %204 = vmatpush1.bf16.msra.mxu0 0
    %205 = vmatprep.subr.bf16.mxu0 0
    %206 = vmatpush1.bf16.msra.mxu0 0
    %207 = vmatprep.subr.bf16.mxu0 0
    %208 = vmatpush1.bf16.msra.mxu0 0
    %209 = vmatprep.subr.bf16.mxu0 0
    %210 = vmatpush1.bf16.msra.mxu0 0
    %211 = vmatprep.subr.bf16.mxu0 0
    %212 = vmatpush1.bf16.msra.mxu0 0
    %213 = vmatprep.mubr.bf16.mxu0 0
    %214 = vmatmul.mubr.bf16.gmra.mrb[0].mxu0 %v179
    %v215 = vpop.f32.mrb[0].mxu0
    %v216 = vadd.f32 %v165, %v215
    %v217 = vpop.f32.mrb[0].mxu0
    %v218 = vpop.f32.mrb[0].mxu0
    %v219 = vpop.f32.mrb[0].mxu0
    %220 = vdwg.mxu0
    %222 = vset.pattern.permute.xlu0 0
    %223 = vperm.xlu0 %222, %v216
    %v224 = vpop.permute.xlu0 %223
    %v225 = vlaneseq
    %v226 = vand.u32 %v225, 127
    %v227 = vlaneseq
    %v228 = vshrl.u32 %v227, 7
    %v229 = vsub.s32 %v226, %v228
    %v230 = vrot.slane %v224, %v229
    %vm232 = vcmask 57344
    %233 = vst.msk [vmem:[#allocation3] sm:$0x1] %vm232, %v230
    // Predicated region
    $region30: #{tpu_custom_call.1} parent=1 // pred_check
      _
    $region31: #{tpu_custom_call.1} parent=1 // pred_check_branch
      %235 = sbr.rel (0) target = $region33
    $region32: #{tpu_custom_call.1} parent=1 // pred_region
      %s237 = ssub.s32 16, 16
      %238 = vsyncadd [#allocation4], %s237
      %s240 = sshll.u32 [#allocation3], 4
      %s241 = int_to_ptr.vmem [resolvable:$true] %s240
      %243 = dma.vmem_to_hbm [thread:$0]  %s241, 16, %s7, [#allocation4]
    $region33: #{tpu_custom_call.1} parent=1 // pred_fallthru
      _
    // Predicated region
    $region34: #{tpu_custom_call.1} parent=1 // pred_check
      _
    $region35: #{tpu_custom_call.1} parent=1 // pred_check_branch
      %245 = sbr.rel (0) target = $region37
    $region36: #{tpu_custom_call.1} parent=1 // pred_region
      %246 = dma.done [#allocation4], 16
    $region37: #{tpu_custom_call.1} parent=1 // pred_fallthru
      _
    %247 = vsyncpa [#allocation4], 1

</llo_original>
